<compile_context>
chip_gen: v5e
topology: v5e:2x2
jax: 0.10.0
libtpu: 0.0.40
codegen_flags: <defaults>
</compile_context>

<pallas_src>
import jax
import jax.numpy as jnp
from jax.experimental import pallas as pl
from jax.experimental.pallas import tpu as pltpu


def channel_attention_kernel(x_ref, w1_ref, b1_ref, w2_ref, b2_ref, o_ref):
    """One batch element per grid step.

    x_ref:  (1, C, HW)  input block — channels on sublanes, spatial on lanes
    w1_ref: (Cr, C)     first 1x1 conv weight (torch layout: Cout, Cin)
    b1_ref: (Cr, 1)     first 1x1 conv bias (column vector)
    w2_ref: (C, Cr)     second 1x1 conv weight
    b2_ref: (C, 1)      second 1x1 conv bias
    o_ref:  (1, C, 1)   channel-attention output
    """
    _, C, HW = x_ref.shape
    inv_hw = 1.0 / float(HW)

    x = x_ref[0].astype(jnp.float32)                       # (C, HW), lane-dense

    # Global average pool: per-channel mean over the lane (spatial) axis.
    gap = jnp.sum(x, axis=1, keepdims=True) * inv_hw       # (C, 1)

    # Conv1x1 (C -> Cr) + bias + ReLU  (column-form matvec, f32 accumulation).
    h = jnp.dot(w1_ref[...].astype(jnp.float32), gap,
                preferred_element_type=jnp.float32) + b1_ref[...].astype(jnp.float32)
    h = jnp.maximum(h, 0.0)                                 # (Cr, 1)

    # Conv1x1 (Cr -> C) + bias.
    out = jnp.dot(w2_ref[...].astype(jnp.float32), h,
                  preferred_element_type=jnp.float32) + b2_ref[...].astype(jnp.float32)

    o_ref[0] = out.astype(o_ref.dtype)                      # (C, 1)


def channel_attention_forward(x_nchw, params):
    """x_nchw: (B, C, H, W).  Returns (B, C, 1, 1), matching the PyTorch module."""
    B, C, H, W = x_nchw.shape
    w1, b1, w2, b2 = params
    Cr = w1.shape[0]
    HW = H * W

    # Contiguous NCHW -> (B, C, H*W): a free reshape that puts H*W on the lane axis.
    x_flat = x_nchw.reshape(B, C, HW)

    out = pl.pallas_call(
        channel_attention_kernel,
        out_shape=jax.ShapeDtypeStruct((B, C, 1), x_nchw.dtype),
        grid_spec=pltpu.PrefetchScalarGridSpec(
            num_scalar_prefetch=0,
            grid=(B,),
            in_specs=[
                pl.BlockSpec((1, C, HW), lambda b: (b, 0, 0)),   # x (one batch elem)
                pl.BlockSpec((Cr, C),    lambda b: (0, 0)),      # conv1 weight
                pl.BlockSpec((Cr, 1),    lambda b: (0, 0)),      # conv1 bias
                pl.BlockSpec((C, Cr),    lambda b: (0, 0)),      # conv2 weight
                pl.BlockSpec((C, 1),     lambda b: (0, 0)),      # conv2 bias
            ],
            out_specs=pl.BlockSpec((1, C, 1), lambda b: (b, 0, 0)),
        ),
        compiler_params=pltpu.CompilerParams(
            dimension_semantics=("parallel",)),   # B>=2 steps -> both v7x TensorCores
    )(x_flat, w1, b1, w2, b2)

    return out.reshape(B, C, 1, 1)


def channel_attention_reference(x_nchw, params):
    """Pure-JAX reference of the PyTorch ChannelAttention forward."""
    w1, b1, w2, b2 = params
    gap = jnp.mean(x_nchw.astype(jnp.float32), axis=(2, 3))        # (B, C)
    h = jnp.maximum(gap @ w1.T + b1[:, 0], 0.0)                    # (B, Cr)
    out = h @ w2.T + b2[:, 0]                                      # (B, C)
    return out[:, :, None, None].astype(x_nchw.dtype)


if __name__ == "__main__":
    B, dim, H, W = 2, 32, 16, 16     # dim=32, reduction=8 -> hidden channels = 4
    reduction = 8
    Cr = dim // reduction

    key = jax.random.PRNGKey(0)
    ks = jax.random.split(key, 5)
    x = jax.random.normal(ks[0], (B, dim, H, W), jnp.float32)
    # Deterministic synthetic parameters in torch Conv2d layout (Cout, Cin); biases
    # stored as column vectors for the kernel's column-form matvecs.
    w1 = 0.1 * jax.random.normal(ks[1], (Cr, dim), jnp.float32)
    b1 = 0.1 * jax.random.normal(ks[2], (Cr, 1), jnp.float32)
    w2 = 0.1 * jax.random.normal(ks[3], (dim, Cr), jnp.float32)
    b2 = 0.1 * jax.random.normal(ks[4], (dim, 1), jnp.float32)
    params = (w1, b1, w2, b2)

    out = channel_attention_forward(x, params)
    out = jax.block_until_ready(out)

    ref = channel_attention_reference(x, params)
    assert out.shape == (B, dim, 1, 1)
    assert jnp.allclose(out, ref, atol=1e-4, rtol=1e-4), "mismatch vs JAX reference"

    print("KERNEL_OK")
</pallas_src>

<mosaic_0001>
module attributes {stable_mosaic.version = 11 : i64} {
  func.func @channel_attention_kernel(%arg0: i32, %arg1: memref<1x32x256xf32, #tpu.memory_space<vmem>>, %arg2: memref<4x32xf32, #tpu.memory_space<vmem>>, %arg3: memref<4x1xf32, #tpu.memory_space<vmem>>, %arg4: memref<32x4xf32, #tpu.memory_space<vmem>>, %arg5: memref<32x1xf32, #tpu.memory_space<vmem>>, %arg6: memref<1x32x1xf32, #tpu.memory_space<vmem>>) attributes {dimension_semantics = [#tpu.dimension_semantics<parallel>], iteration_bounds = array<i64: 2>, scalar_prefetch = 0 : i64, scratch_operands = 0 : i64, tpu.core_type = #tpu.core_type<tc>, window_params = [{transform_indices = @transform_0, window_bounds = array<i64: 1, 32, 256>}, {pipeline_mode = #tpu.pipeline_mode<synchronous>, transform_indices = @transform_1, window_bounds = array<i64: 4, 32>}, {pipeline_mode = #tpu.pipeline_mode<synchronous>, transform_indices = @transform_2, window_bounds = array<i64: 4, 1>}, {pipeline_mode = #tpu.pipeline_mode<synchronous>, transform_indices = @transform_3, window_bounds = array<i64: 32, 4>}, {pipeline_mode = #tpu.pipeline_mode<synchronous>, transform_indices = @transform_4, window_bounds = array<i64: 32, 1>}, {transform_indices = @transform_5, window_bounds = array<i64: 1, 32, 1>}]} {
    %c0 = arith.constant 0 : index
    %c0_0 = arith.constant 0 : index
    %c0_1 = arith.constant 0 : index
    %0 = vector.load %arg1[%c0, %c0_0, %c0_1] : memref<1x32x256xf32, #tpu.memory_space<vmem>>, vector<1x32x256xf32>
    %1 = vector.shape_cast %0 : vector<1x32x256xf32> to vector<32x256xf32>
    %cst = arith.constant dense<0.000000e+00> : vector<32xf32>
    %2 = vector.multi_reduction <add>, %1, %cst [1] : vector<32x256xf32> to vector<32xf32>
    %3 = vector.shape_cast %2 : vector<32xf32> to vector<32x1xf32>
    %cst_2 = arith.constant 3.906250e-03 : f32
    %4 = vector.broadcast %cst_2 : f32 to vector<32x1xf32>
    %5 = arith.mulf %3, %4 : vector<32x1xf32>
    %c0_3 = arith.constant 0 : index
    %c0_4 = arith.constant 0 : index
    %6 = vector.load %arg2[%c0_3, %c0_4] : memref<4x32xf32, #tpu.memory_space<vmem>>, vector<4x32xf32>
    %cst_5 = arith.constant dense<0.000000e+00> : vector<4x1xf32>
    %7 = tpu.matmul %6, %5, %cst_5 {dimension_numbers = #tpu.dot_dimension_numbers<[1], [0], [0], [1], [0, 0, 1, 1], [], []>} : vector<4x32xf32>, vector<32x1xf32>, vector<4x1xf32> -> vector<4x1xf32>
    %c0_6 = arith.constant 0 : index
    %c0_7 = arith.constant 0 : index
    %8 = vector.load %arg3[%c0_6, %c0_7] : memref<4x1xf32, #tpu.memory_space<vmem>>, vector<4x1xf32>
    %9 = arith.addf %7, %8 : vector<4x1xf32>
    %cst_8 = arith.constant 0.000000e+00 : f32
    %10 = vector.broadcast %cst_8 : f32 to vector<4x1xf32>
    %11 = arith.maximumf %9, %10 : vector<4x1xf32>
    %c0_9 = arith.constant 0 : index
    %c0_10 = arith.constant 0 : index
    %12 = vector.load %arg4[%c0_9, %c0_10] : memref<32x4xf32, #tpu.memory_space<vmem>>, vector<32x4xf32>
    %cst_11 = arith.constant dense<0.000000e+00> : vector<32x1xf32>
    %13 = tpu.matmul %12, %11, %cst_11 {dimension_numbers = #tpu.dot_dimension_numbers<[1], [0], [0], [1], [0, 0, 1, 1], [], []>} : vector<32x4xf32>, vector<4x1xf32>, vector<32x1xf32> -> vector<32x1xf32>
    %c0_12 = arith.constant 0 : index
    %c0_13 = arith.constant 0 : index
    %14 = vector.load %arg5[%c0_12, %c0_13] : memref<32x1xf32, #tpu.memory_space<vmem>>, vector<32x1xf32>
    %15 = arith.addf %13, %14 : vector<32x1xf32>
    %c0_14 = arith.constant 0 : index
    %c0_15 = arith.constant 0 : index
    %c0_16 = arith.constant 0 : index
    %16 = vector.load %arg6[%c0_14, %c0_15, %c0_16] : memref<1x32x1xf32, #tpu.memory_space<vmem>>, vector<1x32x1xf32>
    %17 = vector.shape_cast %16 : vector<1x32x1xf32> to vector<32x1xf32>
    %18 = vector.shape_cast %15 : vector<32x1xf32> to vector<1x32x1xf32>
    tpu.vector_store %arg6[%c0_14, %c0_15, %c0_16], %18 {strides = array<i32>} : memref<1x32x1xf32, #tpu.memory_space<vmem>>, vector<1x32x1xf32>,
    return
  }
  func.func @transform_0(%arg0: i32) -> (i32, i32, i32) {
    %c0_i32 = arith.constant 0 : i32
    %c0_i32_0 = arith.constant 0 : i32
    %c0_i32_1 = arith.constant 0 : i32
    return %arg0, %c0_i32, %c0_i32_0 : i32, i32, i32
  }
  func.func @transform_1(%arg0: i32) -> (i32, i32) {
    %c0_i32 = arith.constant 0 : i32
    %c0_i32_0 = arith.constant 0 : i32
    %c0_i32_1 = arith.constant 0 : i32
    return %c0_i32, %c0_i32_0 : i32, i32
  }
  func.func @transform_2(%arg0: i32) -> (i32, i32) {
    %c0_i32 = arith.constant 0 : i32
    %c0_i32_0 = arith.constant 0 : i32
    %c0_i32_1 = arith.constant 0 : i32
    return %c0_i32, %c0_i32_0 : i32, i32
  }
  func.func @transform_3(%arg0: i32) -> (i32, i32) {
    %c0_i32 = arith.constant 0 : i32
    %c0_i32_0 = arith.constant 0 : i32
    %c0_i32_1 = arith.constant 0 : i32
    return %c0_i32, %c0_i32_0 : i32, i32
  }
  func.func @transform_4(%arg0: i32) -> (i32, i32) {
    %c0_i32 = arith.constant 0 : i32
    %c0_i32_0 = arith.constant 0 : i32
    %c0_i32_1 = arith.constant 0 : i32
    return %c0_i32, %c0_i32_0 : i32, i32
  }
  func.func @transform_5(%arg0: i32) -> (i32, i32, i32) {
    %c0_i32 = arith.constant 0 : i32
    %c0_i32_0 = arith.constant 0 : i32
    %c0_i32_1 = arith.constant 0 : i32
    return %arg0, %c0_i32, %c0_i32_0 : i32, i32, i32
  }
}

</mosaic_0001>

<llo_original>
// kernel: tpu_custom_call.1
$region0: #{tpu_custom_call.1}
  #allocation0 [shape = 'u32[]', space=smem, size = 0x4, offset = 0x4, fixed_abs, tag = 'smem constant byte address 0x4 - core index']
  #allocation1 [shape = 'u32[72,128]{1,0:T(1,128)}', space=vmem, size = 0x9000, scoped, tag = 'internal scratch']
  %s0 = inlined_call_operand.hbm [shape: f32[2,32,256], index: 0, kind: input, shape index: {}]
  %s1 = inlined_call_operand.vmem [shape: f32[4,32], index: 1, kind: input, shape index: {}]
  %s2 = inlined_call_operand.vmem [shape: f32[4,1], index: 2, kind: input, shape index: {}]
  %s3 = inlined_call_operand.vmem [shape: f32[32,4], index: 3, kind: input, shape index: {}]
  %s4 = inlined_call_operand.vmem [shape: f32[32,1], index: 4, kind: input, shape index: {}]
  %s5 = inlined_call_operand.vmem [shape: f32[2,32,1], index: 5, kind: output, shape index: {}]
  %s6 = sld [smem:[#allocation0]]
  $region57: #{tpu_custom_call.1} parent=0
    _
  %s8 = ssub.s32 1, %s6
  %s9 = scalar_select 0, %s8, %s6
  $region1: #{tpu_custom_call.1} parent=0
    #allocation2 [shape = 'u8[65536]{0}', space=vmem, size = 0x10000, scoped, tag = 'input window, operand 0']
    #allocation3 [shape = 's32[2]{0}', space=sflag, size = 0x8, scoped, tag = 'scoped memory for tpu_custom_call.1']
    %10 = vsyncpa [#allocation3], 0
    %s11 = scalar_lea.sflag [#allocation3], 1
    %12 = vsyncpa %s11, 0
    loop: start=0, step=1, limit=4
    $region2: #{tpu_custom_call.1} parent=1 // loop_pre_header
      _
    $region3: #{tpu_custom_call.1} parent=1 // loop_header
      %s14 = sphi 0, %s18
      %p15 = scmp.ge.s32.totalorder %s14, 4
      %s24 = sphi 0, %s26
      %s27 = sphi 0, %s24
      %s28 = sphi 0, %s27
      %s44 = sphi 0, %s28
      %s48 = sphi 0, %s48
      %s50 = sphi 0, %s48
      %s51 = sphi 0, %s50
      %s65 = sphi 0, %s51
      %s69 = sphi 0, %s69
      %s71 = sphi 0, %s69
      %s72 = sphi 0, %s71
      %s86 = sphi 0, %s72
      %s90 = sphi 0, %s90
      %s92 = sphi 0, %s90
      %s93 = sphi 0, %s92
      %s107 = sphi 0, %s93
      %s111 = sphi 0, %s111
      %s113 = sphi 0, %s111
      %s114 = sphi 0, %s113
      %s128 = sphi 0, %s114
      %s134 = sphi 0, %s136
      %s137 = sphi 0, %s134
      %s138 = sphi 0, %s137
      %s154 = sphi 0, %s138
    $region4: #{tpu_custom_call.1} parent=1 // loop_header_branch
      %17 = sbr.rel (%p15) target = $region8
    $region5: #{tpu_custom_call.1} parent=1 // loop_body
      %s19 = ssub.s32 %s14, 1
      %s20 = ssub.s32 %s14, 2
      %s21 = sadd.s32 %s14, 1
      %s22 = ssub.s32 %s14, %s21
      %p23 = scmp.eq.s32.totalorder %s22, 0
      %s25 = sadd.s32 %s24, 1
      %s26 = scalar_select %p23, %s24, %s25
      %p29 = pneg %p23
      %p30 = scmp.eq.s32.totalorder %s14, 1
      %p31 = por %p29, %p30
      %p32 = scmp.ne.s32.totalorder %s24, %s27
      %p33 = scmp.eq.s32.totalorder %s14, 0
      %p34 = por %p32, %p33
      %p35 = scmp.ne.s32.totalorder %s24, %s27
      %p36 = scmp.eq.s32.totalorder %s19, 1
      %p37 = por %p35, %p36
      %p38 = scmp.ne.s32.totalorder %s27, %s28
      %p39 = scmp.eq.s32.totalorder %s19, 0
      %p40 = por %p38, %p39
      %p41 = scmp.ne.s32.totalorder %s27, %s28
      %p42 = scmp.eq.s32.totalorder %s20, 1
      %p43 = por %p41, %p42
      %p45 = scmp.ne.s32.totalorder %s28, %s44
      %p46 = scmp.eq.s32.totalorder %s20, 0
      %p47 = por %p45, %p46
      %s49 = sadd.s32 %s48, 1
      %p52 = scmp.eq.s32.totalorder %s14, 1
      %p53 = scmp.ne.s32.totalorder %s48, %s50
      %p54 = scmp.eq.s32.totalorder %s14, 0
      %p55 = por %p53, %p54
      %p56 = scmp.ne.s32.totalorder %s48, %s50
      %p57 = scmp.eq.s32.totalorder %s19, 1
      %p58 = por %p56, %p57
      %p59 = scmp.ne.s32.totalorder %s50, %s51
      %p60 = scmp.eq.s32.totalorder %s19, 0
      %p61 = por %p59, %p60
      %p62 = scmp.ne.s32.totalorder %s50, %s51
      %p63 = scmp.eq.s32.totalorder %s20, 1
      %p64 = por %p62, %p63
      %p66 = scmp.ne.s32.totalorder %s51, %s65
      %p67 = scmp.eq.s32.totalorder %s20, 0
      %p68 = por %p66, %p67
      %s70 = sadd.s32 %s69, 1
      %p73 = scmp.eq.s32.totalorder %s14, 1
      %p74 = scmp.ne.s32.totalorder %s69, %s71
      %p75 = scmp.eq.s32.totalorder %s14, 0
      %p76 = por %p74, %p75
      %p77 = scmp.ne.s32.totalorder %s69, %s71
      %p78 = scmp.eq.s32.totalorder %s19, 1
      %p79 = por %p77, %p78
      %p80 = scmp.ne.s32.totalorder %s71, %s72
      %p81 = scmp.eq.s32.totalorder %s19, 0
      %p82 = por %p80, %p81
      %p83 = scmp.ne.s32.totalorder %s71, %s72
      %p84 = scmp.eq.s32.totalorder %s20, 1
      %p85 = por %p83, %p84
      %p87 = scmp.ne.s32.totalorder %s72, %s86
      %p88 = scmp.eq.s32.totalorder %s20, 0
      %p89 = por %p87, %p88
      %s91 = sadd.s32 %s90, 1
      %p94 = scmp.eq.s32.totalorder %s14, 1
      %p95 = scmp.ne.s32.totalorder %s90, %s92
      %p96 = scmp.eq.s32.totalorder %s14, 0
      %p97 = por %p95, %p96
      %p98 = scmp.ne.s32.totalorder %s90, %s92
      %p99 = scmp.eq.s32.totalorder %s19, 1
      %p100 = por %p98, %p99
      %p101 = scmp.ne.s32.totalorder %s92, %s93
      %p102 = scmp.eq.s32.totalorder %s19, 0
      %p103 = por %p101, %p102
      %p104 = scmp.ne.s32.totalorder %s92, %s93
      %p105 = scmp.eq.s32.totalorder %s20, 1
      %p106 = por %p104, %p105
      %p108 = scmp.ne.s32.totalorder %s93, %s107
      %p109 = scmp.eq.s32.totalorder %s20, 0
      %p110 = por %p108, %p109
      %s112 = sadd.s32 %s111, 1
      %p115 = scmp.eq.s32.totalorder %s14, 1
      %p116 = scmp.ne.s32.totalorder %s111, %s113
      %p117 = scmp.eq.s32.totalorder %s14, 0
      %p118 = por %p116, %p117
      %p119 = scmp.ne.s32.totalorder %s111, %s113
      %p120 = scmp.eq.s32.totalorder %s19, 1
      %p121 = por %p119, %p120
      %p122 = scmp.ne.s32.totalorder %s113, %s114
      %p123 = scmp.eq.s32.totalorder %s19, 0
      %p124 = por %p122, %p123
      %p125 = scmp.ne.s32.totalorder %s113, %s114
      %p126 = scmp.eq.s32.totalorder %s20, 1
      %p127 = por %p125, %p126
      %p129 = scmp.ne.s32.totalorder %s114, %s128
      %p130 = scmp.eq.s32.totalorder %s20, 0
      %p131 = por %p129, %p130
      %s132 = ssub.s32 %s14, %s21
      %p133 = scmp.eq.s32.totalorder %s132, 0
      %s135 = sadd.s32 %s134, 1
      %s136 = scalar_select %p133, %s134, %s135
      %p139 = pneg %p133
      %p140 = scmp.eq.s32.totalorder %s14, 1
      %p141 = por %p139, %p140
      %p142 = scmp.ne.s32.totalorder %s134, %s137
      %p143 = scmp.eq.s32.totalorder %s14, 0
      %p144 = por %p142, %p143
      %p145 = scmp.ne.s32.totalorder %s134, %s137
      %p146 = scmp.eq.s32.totalorder %s19, 1
      %p147 = por %p145, %p146
      %p148 = scmp.ne.s32.totalorder %s137, %s138
      %p149 = scmp.eq.s32.totalorder %s19, 0
      %p150 = por %p148, %p149
      %p151 = scmp.ne.s32.totalorder %s137, %s138
      %p152 = scmp.eq.s32.totalorder %s20, 1
      %p153 = por %p151, %p152
      %p155 = scmp.ne.s32.totalorder %s138, %s154
      %p156 = scmp.eq.s32.totalorder %s20, 0
      %p157 = por %p155, %p156
      %p158 = scmp.le.s32.totalorder 1, %s14
      %p159 = scmp.lt.s32.totalorder %s14, 3
      %p160 = pnand %p158, %p159
      %p161 = pneg %p160
      // Predicated region
      $region9: #{tpu_custom_call.1} parent=5 // pred_check
        _
      $region10: #{tpu_custom_call.1} parent=5 // pred_check_branch
        %163 = sbr.rel (%p160) target = $region12
      $region11: #{tpu_custom_call.1} parent=5 // pred_region
        %s164 = ssub.s32 %s14, 1
        // Predicated region
        $region13: #{tpu_custom_call.1} parent=11 // pred_check
          %p165 = pneg %p61
        $region14: #{tpu_custom_call.1} parent=11 // pred_check_branch
          %167 = sbr.rel (%p165) target = $region16
        $region15: #{tpu_custom_call.1} parent=11 // pred_region
          _
        $region16: #{tpu_custom_call.1} parent=11 // pred_fallthru
          _
        // Predicated region
        $region17: #{tpu_custom_call.1} parent=11 // pred_check
          %p168 = pneg %p82
        $region18: #{tpu_custom_call.1} parent=11 // pred_check_branch
          %170 = sbr.rel (%p168) target = $region20
        $region19: #{tpu_custom_call.1} parent=11 // pred_region
          _
        $region20: #{tpu_custom_call.1} parent=11 // pred_fallthru
          _
        // Predicated region
        $region21: #{tpu_custom_call.1} parent=11 // pred_check
          %p171 = pneg %p103
        $region22: #{tpu_custom_call.1} parent=11 // pred_check_branch
          %173 = sbr.rel (%p171) target = $region24
        $region23: #{tpu_custom_call.1} parent=11 // pred_region
          _
        $region24: #{tpu_custom_call.1} parent=11 // pred_fallthru
          _
        // Predicated region
        $region25: #{tpu_custom_call.1} parent=11 // pred_check
          %p174 = pneg %p124
        $region26: #{tpu_custom_call.1} parent=11 // pred_check_branch
          %176 = sbr.rel (%p174) target = $region28
        $region27: #{tpu_custom_call.1} parent=11 // pred_region
          _
        $region28: #{tpu_custom_call.1} parent=11 // pred_fallthru
          _
      $region12: #{tpu_custom_call.1} parent=5 // pred_fallthru
        _
      %p177 = scmp.lt.s32.totalorder %s14, 2
      // Predicated region
      $region29: #{tpu_custom_call.1} parent=5 // pred_check
        %p178 = pneg %p177
      $region30: #{tpu_custom_call.1} parent=5 // pred_check_branch
        %180 = sbr.rel (%p178) target = $region32
      $region31: #{tpu_custom_call.1} parent=5 // pred_region
        // Predicated region
        $region33: #{tpu_custom_call.1} parent=31 // pred_check
          %p181 = pneg %p34
        $region34: #{tpu_custom_call.1} parent=31 // pred_check_branch
          %183 = sbr.rel (%p181) target = $region36
        $region35: #{tpu_custom_call.1} parent=31 // pred_region
          %s184 = sand.u32 %s24, 1
          %s185 = scalar_lea.sflag [#allocation3], %s184
          %s186 = sand.u32 %s24, 1
          %s187 = smul.addr %s186, 64
          %s188 = scalar_lea.vmem [#allocation2], %s187
          %190 = vsyncadd %s185, 0
          %s191 = smul.addr %s14, 8
          %s192 = smul.addr %s191, 8
          %s193 = scalar_lea.hbm %s0, %s192
          %s194 = sshll.u32 %s193, 4
          %s195 = int_to_ptr.hbm [resolvable:$true] %s194
          %s196 = sshll.u32 %s188, 4
          %s197 = int_to_ptr.vmem [resolvable:$true] %s196
          %202 = dma.hbm_to_vmem [thread:$0]  %s195, 1024, %s197, %s185, 256, 256, 16
        $region36: #{tpu_custom_call.1} parent=31 // pred_fallthru
          _
      $region32: #{tpu_custom_call.1} parent=5 // pred_fallthru
        _
      %p203 = scmp.le.s32.totalorder 1, %s14
      %p204 = scmp.lt.s32.totalorder %s14, 3
      %p205 = pnand %p203, %p204
      %p206 = pneg %p205
      // Predicated region
      $region37: #{tpu_custom_call.1} parent=5 // pred_check
        _
      $region38: #{tpu_custom_call.1} parent=5 // pred_check_branch
        %208 = sbr.rel (%p205) target = $region40
      $region39: #{tpu_custom_call.1} parent=5 // pred_region
        %s209 = ssub.s32 %s14, 1
        %s210 = sand.u32 %s27, 1
        %s211 = scalar_lea.sflag [#allocation3], %s210
        %s212 = sand.u32 %s27, 1
        %s213 = smul.addr %s212, 64
        %s214 = scalar_lea.vmem [#allocation2], %s213
        // Predicated region
        $region41: #{tpu_custom_call.1} parent=39 // pred_check
          %p215 = pneg %p40
        $region42: #{tpu_custom_call.1} parent=39 // pred_check_branch
          %217 = sbr.rel (%p215) target = $region44
        $region43: #{tpu_custom_call.1} parent=39 // pred_region
          %219 = dma.done %s211, 1024
        $region44: #{tpu_custom_call.1} parent=39 // pred_fallthru
          _
        %s220 = sand.u32 %s27, 1
        %s221 = scalar_lea.sflag [#allocation3], %s220
        %s222 = sand.u32 %s27, 1
        %s223 = smul.addr %s222, 64
        %s224 = scalar_lea.vmem [#allocation2], %s223
        %p225 = pneg %p40
        %p226 = pneg %p37
        %p227 = pneg %p61
        %p228 = pneg %p58
        %p229 = pneg %p82
        %p230 = pneg %p79
        %p231 = pneg %p103
        %p232 = pneg %p100
        %p233 = pneg %p124
        %p234 = pneg %p121
        %p235 = pneg %p150
        %p236 = pneg %p147
        %p237 = scmp.lt.s32.totalorder %s19, 1
        %s238 = scalar_select %p237, %s19, 1
        %s239 = smul.addr %s238, 4
        %s240 = smul.addr %s239, 8
        %s241 = scalar_lea.vmem %s5, %s240
        %p242 = scmp.lt.s32.totalorder %s19, 1
        %s243 = scalar_select %p242, %s19, 1
        %s244 = smul.addr %s243, 4
        %s245 = smul.addr %s244, 8
        %s246 = scalar_lea.vmem %s5, %s245
        %v247 = vld [vmem:[%s214] sm:$0xff]
        %v248 = vld [vmem:[%s214 + $0x8] sm:$0xff]
        %v249 = vld [vmem:[%s214 + $0x10] sm:$0xff]
        %v250 = vld [vmem:[%s214 + $0x18] sm:$0xff]
        %v251 = vld [vmem:[%s214 + $0x20] sm:$0xff]
        %v252 = vld [vmem:[%s214 + $0x28] sm:$0xff]
        %v253 = vld [vmem:[%s214 + $0x30] sm:$0xff]
        %v254 = vld [vmem:[%s214 + $0x38] sm:$0xff]
        %v255 = vadd.f32 %v247, %v248
        %256 = vadd.xlane.f32.xlu0 %v255
        %v257 = vpop.xlane.xlu0 %256
        %v258 = vadd.f32 %v249, %v250
        %259 = vadd.xlane.f32.xlu0 %v258
        %v260 = vpop.xlane.xlu0 %259
        %v261 = vadd.f32 %v251, %v252
        %262 = vadd.xlane.f32.xlu0 %v261
        %v263 = vpop.xlane.xlu0 %262
        %v264 = vadd.f32 %v253, %v254
        %265 = vadd.xlane.f32.xlu0 %v264
        %v266 = vpop.xlane.xlu0 %265
        %v267 = vmul.f32 %v257, 0.00390625
        %v268 = vmul.f32 %v260, 0.00390625
        %v269 = vmul.f32 %v263, 0.00390625
        %v270 = vmul.f32 %v266, 0.00390625
        %v271 = vld [vmem:[%s1] sm:$0xf]
        %v272 = vld [vmem:[%s2] sm:$0xf]
        %vm273 = vcmask 261120
        %v275 = vsel %vm273, %v271, 0
        %277 = vmatpush.msra.mxu0 0.0
        %278 = vmatpush.msra.mxu0 0.0
        %279 = vmatpush.msra.mxu0 0.0
        %280 = vmatpush.msra.mxu0 0.0
        %281 = vmatpush.msra.mxu0 0.0
        %282 = vmatpush.msra.mxu0 0.0
        %283 = vmatpush.msra.mxu0 0.0
        %284 = vmatpush.msra.mxu0 0.0
        %285 = vmatpush.msra.mxu0 0.0
        %286 = vmatpush.msra.mxu0 0.0
        %287 = vmatpush.msra.mxu0 0.0
        %288 = vmatpush.msra.mxu0 0.0
        %289 = vmatpush.msra.mxu0 %v270
        %290 = vmatpush.msra.mxu0 %v269
        %291 = vmatpush.msra.mxu0 %v268
        %292 = vmatpush.msra.mxu0 %v267
        %293 = vmatmul.f32.gmra.mxu0 %v275
        %v294 = vpop.f32.mrf.mxu0
        %v295 = vadd.f32 %v272, %v294
        %296 = vdwg.mxu0
        %v297 = vmax.f32 %v295, 0.0
        %v298 = vld [vmem:[%s3] sm:$0xff]
        %v299 = vld [vmem:[%s3 + $0x8] sm:$0xff]
        %v300 = vld [vmem:[%s3 + $0x10] sm:$0xff]
        %v301 = vld [vmem:[%s3 + $0x18] sm:$0xff]
        %v302 = vld [vmem:[%s4] sm:$0xff]
        %v303 = vld [vmem:[%s4 + $0x8] sm:$0xff]
        %v304 = vld [vmem:[%s4 + $0x10] sm:$0xff]
        %v305 = vld [vmem:[%s4 + $0x18] sm:$0xff]
        %vm306 = vcmask 31744
        %v308 = vsel %vm306, %v298, 0
        %v311 = vsel %vm306, %v299, 0
        %v314 = vsel %vm306, %v300, 0
        %v317 = vsel %vm306, %v301, 0
        %vm319 = vcmask 1043456
        %v321 = vsel %vm319, %v297, 0
        %323 = vmatpush.msra.mxu0 0.0
        %324 = vmatpush.msra.mxu0 0.0
        %325 = vmatpush.msra.mxu0 0.0
        %326 = vmatpush.msra.mxu0 0.0
        %327 = vmatpush.msra.mxu0 0.0
        %328 = vmatpush.msra.mxu0 0.0
        %329 = vmatpush.msra.mxu0 0.0
        %330 = vmatpush.msra.mxu0 0.0
        %331 = vmatpush.msra.mxu0 0.0
        %332 = vmatpush.msra.mxu0 0.0
        %333 = vmatpush.msra.mxu0 0.0
        %334 = vmatpush.msra.mxu0 0.0
        %335 = vmatpush.msra.mxu0 0.0
        %336 = vmatpush.msra.mxu0 0.0
        %337 = vmatpush.msra.mxu0 0.0
        %338 = vmatpush.msra.mxu0 %v321
        %339 = vmatmul.f32.gmra.mxu0 %v308
        %v340 = vpop.f32.mrf.mxu0
        %v341 = vadd.f32 %v302, %v340
        %342 = vmatmul.f32.gmra.mxu0 %v311
        %v343 = vpop.f32.mrf.mxu0
        %v344 = vadd.f32 %v303, %v343
        %345 = vmatmul.f32.gmra.mxu0 %v314
        %v346 = vpop.f32.mrf.mxu0
        %v347 = vadd.f32 %v304, %v346
        %348 = vmatmul.f32.gmra.mxu0 %v317
        %v349 = vpop.f32.mrf.mxu0
        %v350 = vadd.f32 %v305, %v349
        %351 = vdwg.mxu0
        %vm352 = vcmask 7168
        %353 = vst.msk [vmem:[%s246] sm:$0xff] %vm352, %v341
        %354 = vst.msk [vmem:[%s246 + $0x8] sm:$0xff] %vm352, %v344
        %355 = vst.msk [vmem:[%s246 + $0x10] sm:$0xff] %vm352, %v347
        %356 = vst.msk [vmem:[%s246 + $0x18] sm:$0xff] %vm352, %v350
        %p357 = scmp.lt.s32.totalorder %s19, 1
        %s358 = scalar_select %p357, %s19, 1
        %s359 = smul.addr %s358, 4
        %s360 = smul.addr %s359, 8
        %s361 = scalar_lea.vmem %s5, %s360
        // Predicated region
        $region45: #{tpu_custom_call.1} parent=39 // pred_check
          %p362 = pneg %p147
        $region46: #{tpu_custom_call.1} parent=39 // pred_check_branch
          %364 = sbr.rel (%p362) target = $region48
        $region47: #{tpu_custom_call.1} parent=39 // pred_region
          _
        $region48: #{tpu_custom_call.1} parent=39 // pred_fallthru
          _
      $region40: #{tpu_custom_call.1} parent=5 // pred_fallthru
        _
      %p365 = scmp.le.s32.totalorder 2, %s14
      // Predicated region
      $region49: #{tpu_custom_call.1} parent=5 // pred_check
        %p366 = pneg %p365
      $region50: #{tpu_custom_call.1} parent=5 // pred_check_branch
        %368 = sbr.rel (%p366) target = $region52
      $region51: #{tpu_custom_call.1} parent=5 // pred_region
        %s369 = ssub.s32 %s14, 2
        // Predicated region
        $region53: #{tpu_custom_call.1} parent=51 // pred_check
          %p370 = pneg %p153
        $region54: #{tpu_custom_call.1} parent=51 // pred_check_branch
          %372 = sbr.rel (%p370) target = $region56
        $region55: #{tpu_custom_call.1} parent=51 // pred_region
          %p373 = scmp.lt.s32.totalorder %s20, 1
          %s374 = scalar_select %p373, %s20, 1
          %s375 = smul.addr %s374, 4
          %s376 = smul.addr %s375, 8
          %s377 = scalar_lea.vmem %s5, %s376
        $region56: #{tpu_custom_call.1} parent=51 // pred_fallthru
          _
      $region52: #{tpu_custom_call.1} parent=5 // pred_fallthru
        _
    $region6: #{tpu_custom_call.1} parent=1 // loop_footer
      %s18 = sadd.s32 1, %s14
    $region7: #{tpu_custom_call.1} parent=1 // loop_footer_branch
      %13 = sbr.rel target = $region3
    $region8: #{tpu_custom_call.1} parent=1 // loop_exit
      _
    %378 = vsyncpa [#allocation3], 1
    %s379 = scalar_lea.sflag [#allocation3], 1
    %380 = vsyncpa %s379, 1

</llo_original>
